<compile_context>
chip_gen: v5e
topology: v5e:2x2
jax: 0.10.0
libtpu: 0.0.40
codegen_flags: <defaults>
</compile_context>

<pallas_src>
import functools

import jax
import jax.numpy as jnp
from jax.experimental import pallas as pl
from jax.experimental.pallas import tpu as pltpu

_LANE = 128
# Candidate lane-dense widths; the widest one dividing the aligned prefix
# wins, so the output spec is always a wide multiple of 128 (unmasked vst).
_LANE_WIDTHS = (4096, 2048, 1024, 512, 256, 128)
# ~4 MiB per block. (in + out) x 2 double-buffers = ~16 MiB VMEM residency:
# under the 32 MiB limit requested below and well inside v7x's 64 MiB
# physical VMEM. Streaming-elementwise sweeps show 85%+ of HBM roofline at
# this block size, and the ~0.35 us per-grid-step overhead is negligible.
_TARGET_BLOCK_BYTES = 4 * 1024 * 1024
_VMEM_LIMIT_BYTES = 32 * 1024 * 1024
# Below ~2 blocks of data a standalone pallas_call (custom call: breaks
# fusion, launch + pipeline warm-up) loses to XLA's fused elementwise.
_MIN_KERNEL_BYTES = 2 * _TARGET_BLOCK_BYTES


def _identity(v):
    return v


# TODO(synk): concrete subclasses replace this with their pointwise op
# (e.g. jax.nn.relu / jax.nn.gelu); the abstract base has no math.
# v5e note: for bf16/fp8 transcendental activations, upcast the tile to f32
# once inside the kernel and prefer EUP-friendly forms
# (pl.reciprocal(approx=True), tanh-approx GELU) so the kernel stays
# HBM-bound instead of flipping to VALU-bound.
_activation_math = _identity


def _activation_kernel(x_ref, o_ref):
    o_ref[...] = _activation_math(x_ref[...])


def _min_sublane(dtype):
    """Minimum legal sublane block dim: 8 (4B), 16 (2B), 32 (1B) dtypes."""
    itemsize = jnp.dtype(dtype).itemsize
    return max(8, 32 // max(itemsize, 1))


def _pick_block_rows(rows, width, itemsize, sublane):
    """Dtype-aware block height; big blocks, >=2 grid steps when possible."""
    if rows <= sublane:
        return rows  # block dim equal to the full array dim is always legal
    if rows < 2 * sublane:
        # Full-dim block: avoids a masked vst.msk partial last block and a
        # second grid step for tiny tensors.
        return rows
    by_bytes = _TARGET_BLOCK_BYTES // (width * itemsize)
    by_bytes = max(sublane, (by_bytes // sublane) * sublane)
    # Cap at ~half the rows (sublane-aligned) so the grid has >= 2 steps and
    # v7x's two TensorCores both stream HBM; harmless on v5e/v6e (1 TC).
    half = (pl.cdiv(rows, 2) // sublane) * sublane
    return min(by_bytes, half)


def activation_forward(x, *, force_kernel=False):
    """Elementwise activation over an NCHW tensor via a tiled Pallas kernel."""
    orig_shape = x.shape
    dtype = x.dtype
    itemsize = jnp.dtype(dtype).itemsize
    n_elems = x.size

    if _activation_math is _identity and not force_kernel:
        # Identity placeholder: no HBM traffic at all.
        return x

    # Small tensors: XLA's fused elementwise is strictly faster than a
    # standalone custom call; Pallas only wins once streaming multiple MiB.
    if not force_kernel and n_elems * itemsize < _MIN_KERNEL_BYTES:
        return _activation_math(x)

    # The kernel streams the 128-aligned prefix; the <128-element ragged tail
    # (if any) is handled in plain jnp. No whole-tensor pad/concat/slice.
    tail = n_elems % _LANE
    n_main = n_elems - tail
    if n_main == 0:
        return _activation_math(x)

    x_flat = jnp.reshape(x, (-1,))
    x_main = x_flat[:n_main] if tail else x_flat

    width = _LANE
    for cand in _LANE_WIDTHS:
        if n_main % cand == 0:
            width = cand
            break
    rows = n_main // width
    x2d = jnp.reshape(x_main, (rows, width))

    sublane = _min_sublane(dtype)
    block_rows = _pick_block_rows(rows, width, itemsize, sublane)
    grid = (pl.cdiv(rows, block_rows),)  # row raggedness handled by cdiv grid

    out2d = pl.pallas_call(
        _activation_kernel,
        out_shape=jax.ShapeDtypeStruct((rows, width), dtype),
        grid_spec=pltpu.PrefetchScalarGridSpec(
            num_scalar_prefetch=0,
            grid=grid,
            in_specs=[pl.BlockSpec((block_rows, width), lambda i: (i, 0))],
            out_specs=pl.BlockSpec((block_rows, width), lambda i: (i, 0)),
        ),
        # Pure elementwise with identical in/out shape+dtype: alias output to
        # the input buffer. Callers should donate the argument at the jit
        # boundary (donate_argnums) for this to be truly in-place.
        input_output_aliases={0: 0},
        # Pure-bandwidth op: 1 read + 1 write of the aligned prefix.
        cost_estimate=pl.CostEstimate(
            flops=0, transcendentals=0,
            bytes_accessed=2 * n_main * itemsize),
        compiler_params=pltpu.CompilerParams(
            dimension_semantics=("parallel",),  # shard grid across TCs on v7x
            vmem_limit_bytes=_VMEM_LIMIT_BYTES),
    )(x2d)

    out_flat = jnp.reshape(out2d, (-1,))
    if tail:
        # Single stitch of the tiny tail (rare: only non-128-multiple sizes).
        out_flat = jnp.concatenate(
            [out_flat, _activation_math(x_flat[n_main:])])
    return jnp.reshape(out_flat, orig_shape)


if __name__ == "__main__":
    key = jax.random.PRNGKey(0)
    # NCHW input, small shape.
    x = jax.random.normal(key, (2, 4, 16, 16), dtype=jnp.float32)

    # Default path: identity short-circuit (no kernel launch while abstract).
    y_fast = activation_forward(x)
    assert y_fast.shape == x.shape and y_fast.dtype == x.dtype
    assert bool(jnp.allclose(y_fast, x))

    # Kernel path (what a concrete subclass would exercise). Donating the
    # argument makes input_output_aliases={0: 0} a true in-place update
    # instead of a silent defensive copy.
    fwd_f32 = jax.jit(functools.partial(activation_forward, force_kernel=True),
                      donate_argnums=0)
    y = fwd_f32(jnp.array(x, copy=True))  # donate a fresh copy; keep x
    jax.block_until_ready(y)
    assert y.shape == x.shape and y.dtype == x.dtype
    assert bool(jnp.allclose(y, x))

    # bf16 input exercises the dtype-aware sublane tiling.
    xb = x.astype(jnp.bfloat16)
    fwd_bf16 = jax.jit(functools.partial(activation_forward, force_kernel=True),
                       donate_argnums=0)
    yb = fwd_bf16(jnp.array(xb, copy=True))
    jax.block_until_ready(yb)
    assert yb.shape == xb.shape and yb.dtype == jnp.bfloat16
    assert bool(jnp.all(yb == xb))

    print("KERNEL_OK")
</pallas_src>

<mosaic_0001>
module attributes {stable_mosaic.version = 11 : i64} {
  func.func @_activation_kernel(%arg0: i32, %arg1: memref<1x2048xf32, #tpu.memory_space<vmem>>, %arg2: memref<1x2048xf32, #tpu.memory_space<vmem>>) attributes {dimension_semantics = [#tpu.dimension_semantics<parallel>], iteration_bounds = array<i64: 1>, scalar_prefetch = 0 : i64, scratch_operands = 0 : i64, tpu.core_type = #tpu.core_type<tc>, window_params = [{transform_indices = @transform_0, window_bounds = array<i64: 1, 2048>}, {transform_indices = @transform_1, window_bounds = array<i64: 1, 2048>}]} {
    %c0 = arith.constant 0 : index
    %c0_0 = arith.constant 0 : index
    %0 = vector.load %arg1[%c0, %c0_0] : memref<1x2048xf32, #tpu.memory_space<vmem>>, vector<1x2048xf32>
    %c0_1 = arith.constant 0 : index
    %c0_2 = arith.constant 0 : index
    %1 = vector.load %arg2[%c0_1, %c0_2] : memref<1x2048xf32, #tpu.memory_space<vmem>>, vector<1x2048xf32>
    tpu.vector_store %arg2[%c0_1, %c0_2], %0 {strides = array<i32>} : memref<1x2048xf32, #tpu.memory_space<vmem>>, vector<1x2048xf32>,
    return
  }
  func.func @transform_0(%arg0: i32) -> (i32, i32) {
    %c0_i32 = arith.constant 0 : i32
    %c0_i32_0 = arith.constant 0 : i32
    return %arg0, %c0_i32 : i32, i32
  }
  func.func @transform_1(%arg0: i32) -> (i32, i32) {
    %c0_i32 = arith.constant 0 : i32
    %c0_i32_0 = arith.constant 0 : i32
    return %arg0, %c0_i32 : i32, i32
  }
}

</mosaic_0001>

<llo_original>
// kernel: activation_forward.1
$region0: #{activation_forward.1}
  #allocation0 [shape = 'u32[]', space=smem, size = 0x4, offset = 0x4, fixed_abs, tag = 'smem constant byte address 0x4 - core index']
  #allocation1 [shape = 'u32[72,128]{1,0:T(1,128)}', space=vmem, size = 0x9000, scoped, tag = 'internal scratch']
  %s0 = inlined_call_operand.vmem [shape: f32[1,2048], index: 0, kind: input, shape index: {}, may-alias: {0,1}]
  %s1 = inlined_call_operand.vmem [shape: f32[1,2048], index: 1, kind: output, shape index: {}, may-alias: {0,1}]
  %s2 = sld [smem:[#allocation0]]
  $region14: #{activation_forward.1} parent=0
    _
  %s4 = ssub.s32 1, %s2
  %s5 = scalar_select 0, %s4, %s2
  // Predicated region
  $region2: #{activation_forward.1} parent=0 // pred_check
    _
  $region3: #{activation_forward.1} parent=0 // pred_check_branch
    %7 = sbr.rel (0) target = $region5
  $region4: #{activation_forward.1} parent=0 // pred_region
    _
  $region5: #{activation_forward.1} parent=0 // pred_fallthru
    _
  %v8 = vld [vmem:[%s0] sm:$0xff]
  %v9 = vld [vmem:[%s0 + $0x8] sm:$0xff]
  %10 = vst [vmem:[%s1] sm:$0xff] %v8
  %11 = vst [vmem:[%s1 + $0x8] sm:$0xff] %v9
  // Predicated region
  $region6: #{activation_forward.1} parent=0 // pred_check
    _
  $region7: #{activation_forward.1} parent=0 // pred_check_branch
    %13 = sbr.rel (0) target = $region9
  $region8: #{activation_forward.1} parent=0 // pred_region
    _
  $region9: #{activation_forward.1} parent=0 // pred_fallthru
    _
  // Predicated region
  $region10: #{activation_forward.1} parent=0 // pred_check
    _
  $region11: #{activation_forward.1} parent=0 // pred_check_branch
    %15 = sbr.rel (0) target = $region13
  $region12: #{activation_forward.1} parent=0 // pred_region
    _
  $region13: #{activation_forward.1} parent=0 // pred_fallthru
    _

</llo_original>
